<compile_context>
chip_gen: v5e
topology: v5e:2x2
jax: 0.10.0
libtpu: 0.0.40
codegen_flags: <defaults>
</compile_context>

<pallas_src>
import functools

import jax
import jax.numpy as jnp
from jax.experimental import pallas as pl
from jax.experimental.pallas import tpu as pltpu


# ---------------------------------------------------------------------------
# Pallas kernel: per-row clamped distance to the label's center
# ---------------------------------------------------------------------------
def _center_dist_kernel(x_ref, ct_ref, lab_ref, out_ref, *,
                        b_actual, b_padded, tile_b):
    i = pl.program_id(0)

    x = x_ref[...]            # (TB, D) float32
    centers = ct_ref[...]     # (C, D)  float32  (resident across tiles)
    lab = lab_ref[...]        # (TB, 1) int32

    C = centers.shape[0]

    # Gather each row's label center via a one-hot MXU matmul.
    # NOTE: labels stay as a (TB,1) VMEM block (cheap) because the one-hot is
    # built from a vector compare; an SMEM/scalar-prefetch gather would need a
    # vectorized SMEM read or per-row grid steps.
    classes = jax.lax.broadcasted_iota(jnp.int32, (tile_b, C), 1)
    onehot = (lab == classes).astype(jnp.float32)                    # (TB, C)
    g = jnp.dot(onehot, centers, preferred_element_type=jnp.float32)  # (TB, D)

    diff = x - g
    d = jnp.sum(diff * diff, axis=1, keepdims=True)                  # (TB, 1)
    d = jnp.clip(d, 1e-12, 1e12)

    if b_actual != b_padded:
        # zero out padded rows so the wrapper-side sum ignores them
        row = jax.lax.broadcasted_iota(jnp.int32, (tile_b, 1), 0) + i * tile_b
        d = jnp.where(row < b_actual, d, 0.0)

    out_ref[...] = d


def _pick_batch_tile(B, C):
    """Multiple-of-8 batch tile, capped so the (TB, C) one-hot stays ~<=4 MiB
    of VMEM (safe for v7x's 64 MiB as well as v5e/v6e's 128 MiB)."""
    b_pad8 = ((B + 7) // 8) * 8
    cap = max(8, (4 * 1024 * 1024) // (4 * max(C, 1)))
    tb = min(512, b_pad8, cap)
    tb = max(8, (tb // 8) * 8)
    return tb


@jax.jit
def _center_loss_pallas(x, centers, labels):
    x = x.astype(jnp.float32)
    centers = centers.astype(jnp.float32)
    labels = labels.astype(jnp.int32)

    B, D = x.shape
    C = centers.shape[0]

    tile_b = _pick_batch_tile(B, C)
    B_pad = ((B + tile_b - 1) // tile_b) * tile_b
    if B_pad != B:
        x = jnp.pad(x, ((0, B_pad - B), (0, 0)))
        labels = jnp.pad(labels, (0, B_pad - B), constant_values=-1)
    labels_2d = labels.reshape(B_pad, 1)

    grid = (B_pad // tile_b,)

    per_row = pl.pallas_call(
        functools.partial(_center_dist_kernel,
                          b_actual=B, b_padded=B_pad, tile_b=tile_b),
        out_shape=jax.ShapeDtypeStruct((B_pad, 1), jnp.float32),
        grid=grid,
        in_specs=[
            pl.BlockSpec((tile_b, D), lambda i: (i, 0)),   # X tile
            pl.BlockSpec((C, D), lambda i: (0, 0)),        # centers, resident
            pl.BlockSpec((tile_b, 1), lambda i: (i, 0)),   # labels tile
        ],
        out_specs=pl.BlockSpec((tile_b, 1), lambda i: (i, 0)),
        compiler_params=pltpu.CompilerParams(
            dimension_semantics=("parallel",)),            # 2 TCs on v7x
    )(x, centers, labels_2d)

    # PyTorch CenterLoss clamps AFTER masking: the B*(C-1) masked-out entries
    # each contribute exactly 1e-12 -- added analytically instead of summed.
    extra = jnp.float32(1e-12 * B * (C - 1))
    return (jnp.sum(per_row) + extra) / jnp.float32(B)


# ---------------------------------------------------------------------------
# Loss_model equivalent
# ---------------------------------------------------------------------------
class LossModelPallas:
    def __init__(self, num_classes, input_feat_size=512, embed_dim=2,
                 loss='softmax', weight=1, key=None):
        self.embed_dim = embed_dim
        self.loss = loss
        self.num_classes = num_classes
        self.weight = weight
        if loss == 'center':
            # CenterLoss parameter: centers ~ N(0,1), shape (num_classes, feat_dim)
            if key is None:
                key = jax.random.PRNGKey(0)
            self.centers = jax.random.normal(
                key, (num_classes, embed_dim), dtype=jnp.float32)
        elif loss == 'softmax':
            self.centers = None
        else:
            # TODO(synk): ACELoss / AMCLoss / AngularPenaltySMLoss sources are
            # not provided in the module; only 'softmax' and 'center' implemented.
            raise NotImplementedError(f"loss type '{loss}' not implemented")

    def __call__(self, X, labels):
        if self.loss == 'softmax':
            # torch.FloatTensor(0) -> empty float32 tensor of shape (0,)
            return jnp.zeros((0,), dtype=jnp.float32)
        # center loss path (Pallas kernel)
        return _center_loss_pallas(X, self.centers, labels)


# ---------------------------------------------------------------------------
# Reference (plain JAX, PyTorch-faithful formula) for sanity checking
# ---------------------------------------------------------------------------
def _center_loss_ref(x, centers, labels):
    B = x.shape[0]
    C = centers.shape[0]
    distmat = (jnp.sum(x * x, axis=1, keepdims=True)
               + jnp.sum(centers * centers, axis=1)[None, :]
               - 2.0 * x @ centers.T)
    mask = (labels[:, None] == jnp.arange(C)[None, :]).astype(jnp.float32)
    dist = jnp.clip(distmat * mask, 1e-12, 1e12)
    return jnp.sum(dist) / B


if __name__ == "__main__":
    key = jax.random.PRNGKey(0)
    k_x, k_lab, k_cent = jax.random.split(key, 3)

    B = 8               # batch
    EMBED_DIM = 2       # embed_dim (module default)
    NUM_CLASSES = 10    # model.fc.out_features (synthetic)

    X = jax.random.normal(k_x, (B, EMBED_DIM), dtype=jnp.float32)
    labels = jax.random.randint(k_lab, (B,), 0, NUM_CLASSES, dtype=jnp.int32)

    # 'softmax' path: empty tensor, no compute
    m_softmax = LossModelPallas(NUM_CLASSES, embed_dim=EMBED_DIM, loss='softmax')
    empty = m_softmax(X, labels)
    assert empty.shape == (0,) and empty.dtype == jnp.float32

    # 'center' path: Pallas kernel
    m_center = LossModelPallas(NUM_CLASSES, embed_dim=EMBED_DIM,
                               loss='center', key=k_cent)
    loss = jax.block_until_ready(m_center(X, labels))

    ref = _center_loss_ref(X, m_center.centers, labels)
    assert jnp.allclose(loss, ref, rtol=1e-5, atol=1e-5), (loss, ref)

    print("KERNEL_OK")
</pallas_src>

<mosaic_0001>
module attributes {stable_mosaic.version = 11 : i64} {
  func.func @_center_dist_kernel(%arg0: i32, %arg1: memref<8x2xf32, #tpu.memory_space<vmem>>, %arg2: memref<10x2xf32, #tpu.memory_space<vmem>>, %arg3: memref<8x1xi32, #tpu.memory_space<vmem>>, %arg4: memref<8x1xf32, #tpu.memory_space<vmem>>) attributes {dimension_semantics = [#tpu.dimension_semantics<parallel>], iteration_bounds = array<i64: 1>, scalar_prefetch = 0 : i64, scratch_operands = 0 : i64, tpu.core_type = #tpu.core_type<tc>, window_params = [{transform_indices = @transform_0, window_bounds = array<i64: 8, 2>}, {pipeline_mode = #tpu.pipeline_mode<synchronous>, transform_indices = @transform_1, window_bounds = array<i64: 10, 2>}, {transform_indices = @transform_2, window_bounds = array<i64: 8, 1>}, {transform_indices = @transform_3, window_bounds = array<i64: 8, 1>}]} {
    %c0 = arith.constant 0 : index
    %c0_0 = arith.constant 0 : index
    %0 = vector.load %arg1[%c0, %c0_0] : memref<8x2xf32, #tpu.memory_space<vmem>>, vector<8x2xf32>
    %c0_1 = arith.constant 0 : index
    %c0_2 = arith.constant 0 : index
    %1 = vector.load %arg2[%c0_1, %c0_2] : memref<10x2xf32, #tpu.memory_space<vmem>>, vector<10x2xf32>
    %c0_3 = arith.constant 0 : index
    %c0_4 = arith.constant 0 : index
    %2 = vector.load %arg3[%c0_3, %c0_4] : memref<8x1xi32, #tpu.memory_space<vmem>>, vector<8x1xi32>
    %3 = tpu.iota {dimensions = array<i32: 1>} : vector<8x10xi32>
    %4 = vector.broadcast %2 : vector<8x1xi32> to vector<8x10xi32>
    %5 = arith.cmpi eq, %4, %3 : vector<8x10xi32>
    %6 = arith.extui %5 : vector<8x10xi1> to vector<8x10xi32>
    %7 = arith.sitofp %6 : vector<8x10xi32> to vector<8x10xf32>
    %cst = arith.constant dense<0.000000e+00> : vector<8x2xf32>
    %8 = tpu.matmul %7, %1, %cst {dimension_numbers = #tpu.dot_dimension_numbers<[1], [0], [0], [1], [0, 0, 1, 1], [], []>} : vector<8x10xf32>, vector<10x2xf32>, vector<8x2xf32> -> vector<8x2xf32>
    %9 = arith.subf %0, %8 : vector<8x2xf32>
    %10 = arith.mulf %9, %9 : vector<8x2xf32>
    %cst_5 = arith.constant dense<0.000000e+00> : vector<8xf32>
    %11 = vector.multi_reduction <add>, %10, %cst_5 [1] : vector<8x2xf32> to vector<8xf32>
    %12 = vector.shape_cast %11 : vector<8xf32> to vector<8x1xf32>
    %cst_6 = arith.constant 9.99999996E-13 : f32
    %cst_7 = arith.constant 9.99999995E+11 : f32
    %13 = vector.broadcast %cst_6 : f32 to vector<8x1xf32>
    %14 = arith.maximumf %13, %12 : vector<8x1xf32>
    %15 = vector.broadcast %cst_7 : f32 to vector<8x1xf32>
    %16 = arith.minimumf %15, %14 : vector<8x1xf32>
    %c0_8 = arith.constant 0 : index
    %c0_9 = arith.constant 0 : index
    %17 = vector.load %arg4[%c0_8, %c0_9] : memref<8x1xf32, #tpu.memory_space<vmem>>, vector<8x1xf32>
    tpu.vector_store %arg4[%c0_8, %c0_9], %16 {strides = array<i32>} : memref<8x1xf32, #tpu.memory_space<vmem>>, vector<8x1xf32>,
    return
  }
  func.func @transform_0(%arg0: i32) -> (i32, i32) {
    %c0_i32 = arith.constant 0 : i32
    %c0_i32_0 = arith.constant 0 : i32
    return %arg0, %c0_i32 : i32, i32
  }
  func.func @transform_1(%arg0: i32) -> (i32, i32) {
    %c0_i32 = arith.constant 0 : i32
    %c0_i32_0 = arith.constant 0 : i32
    %c0_i32_1 = arith.constant 0 : i32
    return %c0_i32, %c0_i32_0 : i32, i32
  }
  func.func @transform_2(%arg0: i32) -> (i32, i32) {
    %c0_i32 = arith.constant 0 : i32
    %c0_i32_0 = arith.constant 0 : i32
    return %arg0, %c0_i32 : i32, i32
  }
  func.func @transform_3(%arg0: i32) -> (i32, i32) {
    %c0_i32 = arith.constant 0 : i32
    %c0_i32_0 = arith.constant 0 : i32
    return %arg0, %c0_i32 : i32, i32
  }
}

</mosaic_0001>

<llo_original>
// kernel: _center_loss_pallas.1
$region0: #{_center_loss_pallas.1}
  #allocation0 [shape = 'u32[]', space=smem, size = 0x4, offset = 0x4, fixed_abs, tag = 'smem constant byte address 0x4 - core index']
  #allocation1 [shape = 'u32[72,128]{1,0:T(1,128)}', space=vmem, size = 0x9000, scoped, tag = 'internal scratch']
  %s0 = inlined_call_operand.vmem [shape: f32[8,2], index: 0, kind: input, shape index: {}]
  %s1 = inlined_call_operand.vmem [shape: f32[10,2], index: 1, kind: input, shape index: {}]
  %s2 = inlined_call_operand.vmem [shape: s32[8,1], index: 2, kind: input, shape index: {}]
  %s3 = inlined_call_operand.vmem [shape: f32[8,1], index: 3, kind: output, shape index: {}]
  %s4 = sld [smem:[#allocation0]]
  $region22: #{_center_loss_pallas.1} parent=0
    _
  %s6 = ssub.s32 1, %s4
  %s7 = scalar_select 0, %s6, %s4
  // Predicated region
  $region2: #{_center_loss_pallas.1} parent=0 // pred_check
    _
  $region3: #{_center_loss_pallas.1} parent=0 // pred_check_branch
    %9 = sbr.rel (0) target = $region5
  $region4: #{_center_loss_pallas.1} parent=0 // pred_region
    _
  $region5: #{_center_loss_pallas.1} parent=0 // pred_fallthru
    _
  // Predicated region
  $region6: #{_center_loss_pallas.1} parent=0 // pred_check
    _
  $region7: #{_center_loss_pallas.1} parent=0 // pred_check_branch
    %11 = sbr.rel (0) target = $region9
  $region8: #{_center_loss_pallas.1} parent=0 // pred_region
    _
  $region9: #{_center_loss_pallas.1} parent=0 // pred_fallthru
    _
  // Predicated region
  $region10: #{_center_loss_pallas.1} parent=0 // pred_check
    _
  $region11: #{_center_loss_pallas.1} parent=0 // pred_check_branch
    %13 = sbr.rel (0) target = $region13
  $region12: #{_center_loss_pallas.1} parent=0 // pred_region
    _
  $region13: #{_center_loss_pallas.1} parent=0 // pred_fallthru
    _
  %v14 = vld [vmem:[%s0] sm:$0xff]
  %v15 = vld [vmem:[%s1] sm:$0xff]
  %v16 = vld [vmem:[%s1 + $0x8] sm:$0x3]
  %v17 = vld [vmem:[%s2] sm:$0xff]
  %v18 = vlaneseq
  %v19 = vand.u32 %v18, 127
  %20 = vset.pattern.permute.xlu0 0
  %21 = vperm.xlu0 %20, %v17
  %v22 = vpop.permute.xlu0 %21
  %vm23 = vcmp.eq.s32.totalorder %v22, %v19
  %v24 = vsel %vm23, 1, 0
  %v25 = vcvt.s32.f32 %v24
  %vm26 = vcmask 80896
  %v28 = vsel %vm26, %v25, 0
  %vm30 = vcmask 1041408
  %v32 = vsel %vm30, %v16, 0
  %34 = vmatpush.msra.mxu0 0.0
  %35 = vmatpush.msra.mxu0 0.0
  %36 = vmatpush.msra.mxu0 0.0
  %37 = vmatpush.msra.mxu0 0.0
  %38 = vmatpush.msra.mxu0 0.0
  %39 = vmatpush.msra.mxu0 0.0
  %40 = vmatpush.msra.mxu0 0.0
  %41 = vmatpush.msra.mxu0 0.0
  %42 = vmatpush.msra.mxu0 0.0
  %43 = vmatpush.msra.mxu0 0.0
  %44 = vmatpush.msra.mxu0 0.0
  %45 = vmatpush.msra.mxu0 0.0
  %46 = vmatpush.msra.mxu0 0.0
  %47 = vmatpush.msra.mxu0 0.0
  %48 = vmatpush.msra.mxu0 %v32
  %49 = vmatpush.msra.mxu0 %v15
  %50 = vmatmul.f32.gmra.mxu0 %v28
  %v51 = vpop.f32.mrf.mxu0
  %v52 = vadd.f32 0.0, %v51
  %53 = vdwg.mxu0
  %v54 = vsub.f32 %v14, %v52
  %v55 = vmul.f32 %v54, %v54
  %vm56 = vcmask 15360
  %v57 = vsel %vm56, %v55, 0.0
  %58 = vadd.xlane.f32.xlu0 %v57
  %v59 = vpop.xlane.xlu0 %58
  %v60 = vmax.f32 %v59, 1e-12
  %v61 = vmin.f32 %v60, 1e+12
  %vm62 = vcmask 7168
  %63 = vst.msk [vmem:[%s3] sm:$0xff] %vm62, %v61
  // Predicated region
  $region14: #{_center_loss_pallas.1} parent=0 // pred_check
    _
  $region15: #{_center_loss_pallas.1} parent=0 // pred_check_branch
    %65 = sbr.rel (0) target = $region17
  $region16: #{_center_loss_pallas.1} parent=0 // pred_region
    _
  $region17: #{_center_loss_pallas.1} parent=0 // pred_fallthru
    _
  // Predicated region
  $region18: #{_center_loss_pallas.1} parent=0 // pred_check
    _
  $region19: #{_center_loss_pallas.1} parent=0 // pred_check_branch
    %67 = sbr.rel (0) target = $region21
  $region20: #{_center_loss_pallas.1} parent=0 // pred_region
    _
  $region21: #{_center_loss_pallas.1} parent=0 // pred_fallthru
    _

</llo_original>
